<compile_context>
chip_gen: v5e
topology: v5e:2x2
jax: 0.10.0
libtpu: 0.0.40
codegen_flags: <defaults>
</compile_context>

<pallas_src>
import functools

import jax
import jax.numpy as jnp
from jax import lax
from jax.experimental import pallas as pl
from jax.experimental.pallas import tpu as pltpu


def _round_up(x, m):
    return (x + m - 1) // m * m


def _fused_tcn_kernel(x_ref, w_ref, b_ref, o_ref, act_ref, *,
                      layer_cfg, ksize, l_final, l_out_pad):
    """Whole TCN stack fused for one batch element, channels-first.

    x_ref  : (1, C_pad, L0_pad)          layer-0 input (seq-padded), compute dtype
    w_ref  : (n_layers, C_pad, K*C_pad)  weight-normalized, im2col-flattened weights
    b_ref  : (n_layers, C_pad, 1)        biases (f32)
    o_ref  : (1, C_pad, L_out_pad)       output, lane-padded to a 128 multiple (f32)
    act_ref: (C_pad, L_buf)              VMEM scratch holding the zero-padded
                                         activation between layers (compute dtype)
    layer_cfg[i] = (dilation_i, L_out_i, pad_of_layer_{i+1})  (static Python ints)
    """
    n_layers = len(layer_cfg)
    a = x_ref[0]                                            # (C_pad, L0_pad)
    for i, (dil, l_out, pad_next) in enumerate(layer_cfg):
        # im2col: K dilation-shifted views stacked on the channel (sublane) axis,
        # so the whole layer is ONE MXU matmul with a K*C_pad-deep contraction
        # (instead of K tiny matmuls + VPU accumulate adds).
        taps = [a[:, t * dil: t * dil + l_out] for t in range(ksize)]
        xk = taps[0] if ksize == 1 else jnp.concatenate(taps, axis=0)
        y = jnp.dot(w_ref[i], xk, preferred_element_type=jnp.float32)  # (C_pad, l_out)
        y = jnp.maximum(y + b_ref[i], 0.0)                  # bias + ReLU, f32 epilogue
        if i + 1 < n_layers:
            y = y.astype(act_ref.dtype)                     # one cast per layer (bf16 path)
            if pad_next > 0:
                # Zeroed-halo scratch for the next layer's sequence padding, kept in
                # VMEM.  Only the 2*pad_next halo columns are (re)cleared -- stale
                # data inside the interior window is fully overwritten by `y`, and
                # anything past l_out + 2*pad_next is never read.
                halo = jnp.zeros((act_ref.shape[0], pad_next), act_ref.dtype)
                act_ref[:, 0:pad_next] = halo
                act_ref[:, pad_next + l_out: l_out + 2 * pad_next] = halo
                act_ref[:, pad_next: pad_next + l_out] = y
                a = act_ref[:, 0: l_out + 2 * pad_next]
            else:
                a = y
        else:
            # Lane-dense writeback: pad the tail with zeros so the store is a full,
            # unmasked (C_pad, L_out_pad) block store; host slices back to L_final.
            if l_out_pad > l_final:
                tail = jnp.zeros((y.shape[0], l_out_pad - l_final), jnp.float32)
                y = jnp.concatenate([y, tail], axis=1)
            o_ref[0] = y.astype(o_ref.dtype)


def _pack_tcn_params(params, input_channels, kernel_size, compute_dtype):
    """Precompute weight-norm + channel padding + im2col flattening ONCE,
    outside the kernel hot path (no per-layer XLA ops between launches)."""
    K = kernel_size
    chans = [input_channels] + [v.shape[0] for (v, _, _) in params]
    c_pad = _round_up(max(chans + [8]), 8)                  # sublane-friendly channels
    w_stack, b_stack = [], []
    for (v, g, b) in params:
        c_out, c_in, _ = v.shape
        # weight_norm (dim=0): w = g * v / ||v|| over dims (1, 2), kept in f32.
        norm = jnp.sqrt(jnp.sum(v * v, axis=(1, 2), keepdims=True))
        w = g * v / norm                                    # (C_out, C_in, K)
        w_p = jnp.zeros((c_pad, c_pad, K), jnp.float32).at[:c_out, :c_in, :].set(w)
        # (C_out, C_in, K) -> (C_out, K, C_in) -> (C_out, K*C_in): tap-major order,
        # matching the in-kernel im2col stacking.
        w_stack.append(jnp.transpose(w_p, (0, 2, 1)).reshape(c_pad, K * c_pad))
        b_stack.append(jnp.zeros((c_pad, 1), jnp.float32).at[:c_out, 0].set(b))
    w_all = jnp.stack(w_stack).astype(compute_dtype)        # (n_layers, C_pad, K*C_pad)
    b_all = jnp.stack(b_stack)                              # (n_layers, C_pad, 1), f32
    return w_all, b_all, c_pad, chans


def tcn_forward(x_ncl, params, kernel_size=2, dilation_base=2,
                compute_dtype=jnp.float32):
    """BaseTCN.forward: x (N, C_in, L) -> (N, num_channels[-1], L_final)."""
    N, C_in, L = x_ncl.shape
    K = kernel_size
    n_layers = len(params)
    w_all, b_all, c_pad, chans = _pack_tcn_params(params, C_in, K, compute_dtype)

    # Static per-layer geometry, mirroring Conv1d(padding=(K-1)*d//2).
    pads, cfg = [], []
    l_cur = L
    for i in range(n_layers):
        d = dilation_base ** i
        p = (K - 1) * d // 2
        pads.append(p)
        l_out = l_cur + 2 * p - d * (K - 1)
        cfg.append((d, l_out))
        l_cur = l_out
    layer_cfg = tuple((cfg[i][0], cfg[i][1],
                       pads[i + 1] if i + 1 < n_layers else 0)
                      for i in range(n_layers))
    L_final = l_cur
    L0_pad = L + 2 * pads[0]
    L_buf = max([cfg[i][1] + 2 * layer_cfg[i][2] for i in range(n_layers)] + [L0_pad, 8])
    L_out_pad = _round_up(max(L_final, 1), 128)             # lane-dense output slab

    # One-time host prep: pad channels to a sublane multiple and apply the layer-0
    # sequence padding.  Input stays in NCL -> channels on sublanes, L on lanes.
    x_p = jnp.pad(x_ncl, ((0, 0), (0, c_pad - C_in), (pads[0], pads[0])))
    x_p = x_p.astype(compute_dtype)

    kernel = functools.partial(_fused_tcn_kernel, layer_cfg=layer_cfg, ksize=K,
                               l_final=L_final, l_out_pad=L_out_pad)

    # NOTE: weights/bias have a constant index_map so they are fetched once; at
    # ~1 KiB here the default double-buffer VMEM cost is negligible.  For very
    # long sequences one would additionally tile L on a second "parallel" grid
    # axis (halo = total receptive field) to bound VMEM/vreg pressure and fill
    # both v7x TensorCores at small N.
    # TODO(synk): add L-tiling with receptive-field halo for very long sequences.
    out = pl.pallas_call(
        kernel,
        out_shape=jax.ShapeDtypeStruct((N, c_pad, L_out_pad), jnp.float32),
        grid_spec=pltpu.PrefetchScalarGridSpec(
            num_scalar_prefetch=0,
            grid=(N,),
            in_specs=[
                pl.BlockSpec((1, c_pad, L0_pad), lambda n: (n, 0, 0)),
                pl.BlockSpec((n_layers, c_pad, K * c_pad), lambda n: (0, 0, 0)),
                pl.BlockSpec((n_layers, c_pad, 1), lambda n: (0, 0, 0)),
            ],
            out_specs=pl.BlockSpec((1, c_pad, L_out_pad), lambda n: (n, 0, 0)),
            scratch_shapes=[pltpu.VMEM((c_pad, L_buf), compute_dtype)],
        ),
        compiler_params=pltpu.CompilerParams(dimension_semantics=("parallel",)),
    )(x_p, w_all, b_all)
    return out[:, :chans[-1], :L_final]


def init_tcn_params(key, input_channels, num_channels, kernel_size=2):
    """Deterministic synthetic params. Each layer stores weight-norm (v, g) + bias,
    exactly like weight_norm(nn.Conv1d(...)) with dim=0."""
    params = []
    in_c = input_channels
    for out_c in num_channels:
        key, k1, k2, k3 = jax.random.split(key, 4)
        v = jax.random.normal(k1, (out_c, in_c, kernel_size), jnp.float32) * 0.3
        g = jax.random.uniform(k2, (out_c, 1, 1), jnp.float32, 0.5, 1.5)
        b = jax.random.normal(k3, (out_c,), jnp.float32) * 0.1
        params.append((v, g, b))
        in_c = out_c
    return params


def tcn_reference(x_ncl, params, kernel_size=2, dilation_base=2):
    """Pure-JAX reference using lax.conv_general_dilated (mirrors PyTorch Conv1d)."""
    x = x_ncl
    for i, (v, g, b) in enumerate(params):
        norm = jnp.sqrt(jnp.sum(v * v, axis=(1, 2), keepdims=True))
        w = g * v / norm
        d = dilation_base ** i
        pad = (kernel_size - 1) * d // 2
        y = lax.conv_general_dilated(
            x, w, window_strides=(1,), padding=[(pad, pad)],
            rhs_dilation=(d,),
            dimension_numbers=("NCH", "OIH", "NCH"))
        x = jnp.maximum(y + b[None, :, None], 0.0)
    return x


if __name__ == "__main__":
    key = jax.random.PRNGKey(0)
    k_x, k_p = jax.random.split(key)

    # Small shapes consistent with the module: batch=2, input_channels=4,
    # seq_len=16, num_channels=[8, 8], kernel_size=2, dilation_base=2.
    N, C_in, L = 2, 4, 16
    num_channels = [8, 8]
    kernel_size, dilation_base = 2, 2

    x = jax.random.normal(k_x, (N, C_in, L), jnp.float32)
    params = init_tcn_params(k_p, C_in, num_channels, kernel_size)

    ref = jax.block_until_ready(tcn_reference(x, params, kernel_size, dilation_base))

    # f32 path: tight check against the conv reference.
    out = jax.block_until_ready(tcn_forward(x, params, kernel_size, dilation_base))
    assert out.shape == ref.shape, (out.shape, ref.shape)
    assert jnp.allclose(out, ref, rtol=1e-5, atol=1e-5), "f32 mismatch vs reference conv"

    # bf16-input / f32-accumulate path (HBM + MXU win on v6e/v7x): loose tolerance.
    out_bf16 = jax.block_until_ready(
        tcn_forward(x, params, kernel_size, dilation_base, compute_dtype=jnp.bfloat16))
    assert out_bf16.shape == ref.shape
    assert jnp.allclose(out_bf16, ref, rtol=5e-2, atol=5e-2), "bf16 mismatch vs reference conv"

    print("KERNEL_OK")
</pallas_src>

<mosaic_0001>
module attributes {stable_mosaic.version = 11 : i64} {
  func.func @_fused_tcn_kernel(%arg0: i32, %arg1: memref<1x8x16xf32, #tpu.memory_space<vmem>>, %arg2: memref<2x8x16xf32, #tpu.memory_space<vmem>>, %arg3: memref<2x8x1xf32, #tpu.memory_space<vmem>>, %arg4: memref<1x8x128xf32, #tpu.memory_space<vmem>>, %arg5: memref<8x17xf32, #tpu.memory_space<vmem>>) attributes {dimension_semantics = [#tpu.dimension_semantics<parallel>], iteration_bounds = array<i64: 2>, scalar_prefetch = 0 : i64, scratch_operands = 1 : i64, tpu.core_type = #tpu.core_type<tc>, window_params = [{transform_indices = @transform_0, window_bounds = array<i64: 1, 8, 16>}, {pipeline_mode = #tpu.pipeline_mode<synchronous>, transform_indices = @transform_1, window_bounds = array<i64: 2, 8, 16>}, {pipeline_mode = #tpu.pipeline_mode<synchronous>, transform_indices = @transform_2, window_bounds = array<i64: 2, 8, 1>}, {transform_indices = @transform_3, window_bounds = array<i64: 1, 8, 128>}]} {
    %c0 = arith.constant 0 : index
    %c0_0 = arith.constant 0 : index
    %c0_1 = arith.constant 0 : index
    %0 = vector.load %arg1[%c0, %c0_0, %c0_1] : memref<1x8x16xf32, #tpu.memory_space<vmem>>, vector<1x8x16xf32>
    %1 = vector.shape_cast %0 : vector<1x8x16xf32> to vector<8x16xf32>
    %2 = vector.extract_strided_slice %1 {offsets = [0, 0], sizes = [8, 15], strides = [1, 1]} : vector<8x16xf32> to vector<8x15xf32>
    %3 = vector.extract_strided_slice %1 {offsets = [0, 1], sizes = [8, 15], strides = [1, 1]} : vector<8x16xf32> to vector<8x15xf32>
    %4 = tpu.concatenate %2, %3 in 0 : vector<8x15xf32>, vector<8x15xf32> -> vector<16x15xf32>
    %c0_2 = arith.constant 0 : index
    %c0_3 = arith.constant 0 : index
    %c0_4 = arith.constant 0 : index
    %5 = vector.load %arg2[%c0_2, %c0_3, %c0_4] : memref<2x8x16xf32, #tpu.memory_space<vmem>>, vector<1x8x16xf32>
    %6 = vector.shape_cast %5 : vector<1x8x16xf32> to vector<8x16xf32>
    %cst = arith.constant dense<0.000000e+00> : vector<8x15xf32>
    %7 = tpu.matmul %6, %4, %cst {dimension_numbers = #tpu.dot_dimension_numbers<[1], [0], [0], [1], [0, 0, 1, 1], [], []>} : vector<8x16xf32>, vector<16x15xf32>, vector<8x15xf32> -> vector<8x15xf32>
    %c0_5 = arith.constant 0 : index
    %c0_6 = arith.constant 0 : index
    %c0_7 = arith.constant 0 : index
    %8 = vector.load %arg3[%c0_5, %c0_6, %c0_7] : memref<2x8x1xf32, #tpu.memory_space<vmem>>, vector<1x8x1xf32>
    %9 = vector.shape_cast %8 : vector<1x8x1xf32> to vector<8x1xf32>
    %10 = vector.broadcast %9 : vector<8x1xf32> to vector<8x15xf32>
    %11 = arith.addf %7, %10 : vector<8x15xf32>
    %cst_8 = arith.constant 0.000000e+00 : f32
    %12 = vector.broadcast %cst_8 : f32 to vector<8x15xf32>
    %13 = arith.maximumf %11, %12 : vector<8x15xf32>
    %cst_9 = arith.constant 0.000000e+00 : f32
    %14 = vector.broadcast %cst_9 : f32 to vector<8x1xf32>
    %c0_10 = arith.constant 0 : index
    %c0_11 = arith.constant 0 : index
    %15 = vector.load %arg5[%c0_10, %c0_11] : memref<8x17xf32, #tpu.memory_space<vmem>>, vector<8x1xf32>
    tpu.vector_store %arg5[%c0_10, %c0_11], %14 {strides = array<i32>} : memref<8x17xf32, #tpu.memory_space<vmem>>, vector<8x1xf32>,
    %c0_12 = arith.constant 0 : index
    %c16 = arith.constant 16 : index
    %16 = vector.load %arg5[%c0_12, %c16] : memref<8x17xf32, #tpu.memory_space<vmem>>, vector<8x1xf32>
    tpu.vector_store %arg5[%c0_12, %c16], %14 {strides = array<i32>} : memref<8x17xf32, #tpu.memory_space<vmem>>, vector<8x1xf32>,
    %c0_13 = arith.constant 0 : index
    %c1 = arith.constant 1 : index
    %17 = vector.load %arg5[%c0_13, %c1] : memref<8x17xf32, #tpu.memory_space<vmem>>, vector<8x15xf32>
    tpu.vector_store %arg5[%c0_13, %c1], %13 {strides = array<i32>} : memref<8x17xf32, #tpu.memory_space<vmem>>, vector<8x15xf32>,
    %c0_14 = arith.constant 0 : index
    %c0_15 = arith.constant 0 : index
    %18 = vector.load %arg5[%c0_14, %c0_15] : memref<8x17xf32, #tpu.memory_space<vmem>>, vector<8x17xf32>
    %19 = vector.extract_strided_slice %18 {offsets = [0, 0], sizes = [8, 15], strides = [1, 1]} : vector<8x17xf32> to vector<8x15xf32>
    %20 = vector.extract_strided_slice %18 {offsets = [0, 2], sizes = [8, 15], strides = [1, 1]} : vector<8x17xf32> to vector<8x15xf32>
    %21 = tpu.concatenate %19, %20 in 0 : vector<8x15xf32>, vector<8x15xf32> -> vector<16x15xf32>
    %c1_16 = arith.constant 1 : index
    %c0_17 = arith.constant 0 : index
    %c0_18 = arith.constant 0 : index
    %22 = vector.load %arg2[%c1_16, %c0_17, %c0_18] : memref<2x8x16xf32, #tpu.memory_space<vmem>>, vector<1x8x16xf32>
    %23 = vector.shape_cast %22 : vector<1x8x16xf32> to vector<8x16xf32>
    %cst_19 = arith.constant dense<0.000000e+00> : vector<8x15xf32>
    %24 = tpu.matmul %23, %21, %cst_19 {dimension_numbers = #tpu.dot_dimension_numbers<[1], [0], [0], [1], [0, 0, 1, 1], [], []>} : vector<8x16xf32>, vector<16x15xf32>, vector<8x15xf32> -> vector<8x15xf32>
    %c1_20 = arith.constant 1 : index
    %c0_21 = arith.constant 0 : index
    %c0_22 = arith.constant 0 : index
    %25 = vector.load %arg3[%c1_20, %c0_21, %c0_22] : memref<2x8x1xf32, #tpu.memory_space<vmem>>, vector<1x8x1xf32>
    %26 = vector.shape_cast %25 : vector<1x8x1xf32> to vector<8x1xf32>
    %27 = vector.broadcast %26 : vector<8x1xf32> to vector<8x15xf32>
    %28 = arith.addf %24, %27 : vector<8x15xf32>
    %cst_23 = arith.constant 0.000000e+00 : f32
    %29 = vector.broadcast %cst_23 : f32 to vector<8x15xf32>
    %30 = arith.maximumf %28, %29 : vector<8x15xf32>
    %cst_24 = arith.constant 0.000000e+00 : f32
    %31 = vector.broadcast %cst_24 : f32 to vector<8x113xf32>
    %32 = tpu.concatenate %30, %31 in 1 : vector<8x15xf32>, vector<8x113xf32> -> vector<8x128xf32>
    %c0_25 = arith.constant 0 : index
    %c0_26 = arith.constant 0 : index
    %c0_27 = arith.constant 0 : index
    %33 = vector.load %arg4[%c0_25, %c0_26, %c0_27] : memref<1x8x128xf32, #tpu.memory_space<vmem>>, vector<1x8x128xf32>
    %34 = vector.shape_cast %33 : vector<1x8x128xf32> to vector<8x128xf32>
    %35 = vector.shape_cast %32 : vector<8x128xf32> to vector<1x8x128xf32>
    tpu.vector_store %arg4[%c0_25, %c0_26, %c0_27], %35 {strides = array<i32>} : memref<1x8x128xf32, #tpu.memory_space<vmem>>, vector<1x8x128xf32>,
    return
  }
  func.func @transform_0(%arg0: i32) -> (i32, i32, i32) {
    %c0_i32 = arith.constant 0 : i32
    %c0_i32_0 = arith.constant 0 : i32
    %c0_i32_1 = arith.constant 0 : i32
    return %arg0, %c0_i32, %c0_i32_0 : i32, i32, i32
  }
  func.func @transform_1(%arg0: i32) -> (i32, i32, i32) {
    %c0_i32 = arith.constant 0 : i32
    %c0_i32_0 = arith.constant 0 : i32
    %c0_i32_1 = arith.constant 0 : i32
    %c0_i32_2 = arith.constant 0 : i32
    return %c0_i32, %c0_i32_0, %c0_i32_1 : i32, i32, i32
  }
  func.func @transform_2(%arg0: i32) -> (i32, i32, i32) {
    %c0_i32 = arith.constant 0 : i32
    %c0_i32_0 = arith.constant 0 : i32
    %c0_i32_1 = arith.constant 0 : i32
    %c0_i32_2 = arith.constant 0 : i32
    return %c0_i32, %c0_i32_0, %c0_i32_1 : i32, i32, i32
  }
  func.func @transform_3(%arg0: i32) -> (i32, i32, i32) {
    %c0_i32 = arith.constant 0 : i32
    %c0_i32_0 = arith.constant 0 : i32
    %c0_i32_1 = arith.constant 0 : i32
    return %arg0, %c0_i32, %c0_i32_0 : i32, i32, i32
  }
}

</mosaic_0001>

<llo_original>
// kernel: tpu_custom_call.1
$region0: #{tpu_custom_call.1}
  #allocation0 [shape = 'u32[]', space=smem, size = 0x4, offset = 0x4, fixed_abs, tag = 'smem constant byte address 0x4 - core index']
  #allocation1 [shape = 'u32[72,128]{1,0:T(1,128)}', space=vmem, size = 0x9000, scoped, tag = 'internal scratch']
  #allocation2 [shape = 'f32[8,17]{1,0:T(8,128)}', space=vmem, size = 0x1000, scoped, tag = 'scratch operand']
  %s0 = inlined_call_operand.vmem [shape: f32[2,8,16], index: 0, kind: input, shape index: {}]
  %s1 = inlined_call_operand.hbm [shape: f32[2,8,16], index: 1, kind: input, shape index: {}]
  %s2 = inlined_call_operand.vmem [shape: f32[2,8,1], index: 2, kind: input, shape index: {}]
  %s3 = inlined_call_operand.hbm [shape: f32[2,8,128], index: 3, kind: output, shape index: {}]
  %s4 = sld [smem:[#allocation0]]
  $region49: #{tpu_custom_call.1} parent=0
    _
  %s6 = ssub.s32 1, %s4
  %s7 = scalar_select 0, %s6, %s4
  $region1: #{tpu_custom_call.1} parent=0
    #allocation3 [shape = 'u8[8192]{0}', space=vmem, size = 0x2000, scoped, tag = 'input window, operand 1, single buffered']
    #allocation4 [shape = 's32[2]{0}', space=sflag, size = 0x8, scoped, tag = 'scoped memory for tpu_custom_call.1']
    #allocation5 [shape = 's32[2]{0}', space=sflag, size = 0x8, scoped, tag = 'scoped memory for tpu_custom_call.1']
    #allocation6 [shape = 'u8[8192]{0}', space=vmem, size = 0x2000, scoped, tag = 'output window, operand 0']
    %8 = vsyncpa [#allocation4], 0
    %9 = vsyncpa [#allocation5], 0
    %s10 = scalar_lea.sflag [#allocation5], 1
    %11 = vsyncpa %s10, 0
    loop: start=0, step=1, limit=4
    $region2: #{tpu_custom_call.1} parent=1 // loop_pre_header
      _
    $region3: #{tpu_custom_call.1} parent=1 // loop_header
      %s13 = sphi 0, %s17
      %p14 = scmp.ge.s32.totalorder %s13, 4
      %s23 = sphi 0, %s25
      %s26 = sphi 0, %s23
      %s27 = sphi 0, %s26
      %s43 = sphi 0, %s27
      %s47 = sphi 0, %s47
      %s49 = sphi 0, %s47
      %s50 = sphi 0, %s49
      %s64 = sphi 0, %s50
      %s68 = sphi 0, %s68
      %s70 = sphi 0, %s68
      %s71 = sphi 0, %s70
      %s85 = sphi 0, %s71
      %s91 = sphi 0, %s93
      %s94 = sphi 0, %s91
      %s95 = sphi 0, %s94
      %s111 = sphi 0, %s95
    $region4: #{tpu_custom_call.1} parent=1 // loop_header_branch
      %16 = sbr.rel (%p14) target = $region8
    $region5: #{tpu_custom_call.1} parent=1 // loop_body
      %s18 = ssub.s32 %s13, 1
      %s19 = ssub.s32 %s13, 2
      %s20 = sadd.s32 %s13, 1
      %s21 = ssub.s32 %s13, %s20
      %p22 = scmp.eq.s32.totalorder %s21, 0
      %s24 = sadd.s32 %s23, 1
      %s25 = scalar_select %p22, %s23, %s24
      %p28 = pneg %p22
      %p29 = scmp.eq.s32.totalorder %s13, 1
      %p30 = por %p28, %p29
      %p31 = scmp.ne.s32.totalorder %s23, %s26
      %p32 = scmp.eq.s32.totalorder %s13, 0
      %p33 = por %p31, %p32
      %p34 = scmp.ne.s32.totalorder %s23, %s26
      %p35 = scmp.eq.s32.totalorder %s18, 1
      %p36 = por %p34, %p35
      %p37 = scmp.ne.s32.totalorder %s26, %s27
      %p38 = scmp.eq.s32.totalorder %s18, 0
      %p39 = por %p37, %p38
      %p40 = scmp.ne.s32.totalorder %s26, %s27
      %p41 = scmp.eq.s32.totalorder %s19, 1
      %p42 = por %p40, %p41
      %p44 = scmp.ne.s32.totalorder %s27, %s43
      %p45 = scmp.eq.s32.totalorder %s19, 0
      %p46 = por %p44, %p45
      %s48 = sadd.s32 %s47, 1
      %p51 = scmp.eq.s32.totalorder %s13, 1
      %p52 = scmp.ne.s32.totalorder %s47, %s49
      %p53 = scmp.eq.s32.totalorder %s13, 0
      %p54 = por %p52, %p53
      %p55 = scmp.ne.s32.totalorder %s47, %s49
      %p56 = scmp.eq.s32.totalorder %s18, 1
      %p57 = por %p55, %p56
      %p58 = scmp.ne.s32.totalorder %s49, %s50
      %p59 = scmp.eq.s32.totalorder %s18, 0
      %p60 = por %p58, %p59
      %p61 = scmp.ne.s32.totalorder %s49, %s50
      %p62 = scmp.eq.s32.totalorder %s19, 1
      %p63 = por %p61, %p62
      %p65 = scmp.ne.s32.totalorder %s50, %s64
      %p66 = scmp.eq.s32.totalorder %s19, 0
      %p67 = por %p65, %p66
      %s69 = sadd.s32 %s68, 1
      %p72 = scmp.eq.s32.totalorder %s13, 1
      %p73 = scmp.ne.s32.totalorder %s68, %s70
      %p74 = scmp.eq.s32.totalorder %s13, 0
      %p75 = por %p73, %p74
      %p76 = scmp.ne.s32.totalorder %s68, %s70
      %p77 = scmp.eq.s32.totalorder %s18, 1
      %p78 = por %p76, %p77
      %p79 = scmp.ne.s32.totalorder %s70, %s71
      %p80 = scmp.eq.s32.totalorder %s18, 0
      %p81 = por %p79, %p80
      %p82 = scmp.ne.s32.totalorder %s70, %s71
      %p83 = scmp.eq.s32.totalorder %s19, 1
      %p84 = por %p82, %p83
      %p86 = scmp.ne.s32.totalorder %s71, %s85
      %p87 = scmp.eq.s32.totalorder %s19, 0
      %p88 = por %p86, %p87
      %s89 = ssub.s32 %s13, %s20
      %p90 = scmp.eq.s32.totalorder %s89, 0
      %s92 = sadd.s32 %s91, 1
      %s93 = scalar_select %p90, %s91, %s92
      %p96 = pneg %p90
      %p97 = scmp.eq.s32.totalorder %s13, 1
      %p98 = por %p96, %p97
      %p99 = scmp.ne.s32.totalorder %s91, %s94
      %p100 = scmp.eq.s32.totalorder %s13, 0
      %p101 = por %p99, %p100
      %p102 = scmp.ne.s32.totalorder %s91, %s94
      %p103 = scmp.eq.s32.totalorder %s18, 1
      %p104 = por %p102, %p103
      %p105 = scmp.ne.s32.totalorder %s94, %s95
      %p106 = scmp.eq.s32.totalorder %s18, 0
      %p107 = por %p105, %p106
      %p108 = scmp.ne.s32.totalorder %s94, %s95
      %p109 = scmp.eq.s32.totalorder %s19, 1
      %p110 = por %p108, %p109
      %p112 = scmp.ne.s32.totalorder %s95, %s111
      %p113 = scmp.eq.s32.totalorder %s19, 0
      %p114 = por %p112, %p113
      %p115 = scmp.le.s32.totalorder 1, %s13
      %p116 = scmp.lt.s32.totalorder %s13, 3
      %p117 = pnand %p115, %p116
      %p118 = pneg %p117
      // Predicated region
      $region9: #{tpu_custom_call.1} parent=5 // pred_check
        _
      $region10: #{tpu_custom_call.1} parent=5 // pred_check_branch
        %120 = sbr.rel (%p117) target = $region12
      $region11: #{tpu_custom_call.1} parent=5 // pred_region
        %s121 = ssub.s32 %s13, 1
        // Predicated region
        $region13: #{tpu_custom_call.1} parent=11 // pred_check
          %p122 = pneg %p60
        $region14: #{tpu_custom_call.1} parent=11 // pred_check_branch
          %124 = sbr.rel (%p122) target = $region16
        $region15: #{tpu_custom_call.1} parent=11 // pred_region
          %126 = vsyncadd [#allocation4], 0
          %s127 = sshll.u32 %s1, 4
          %s128 = int_to_ptr.hbm [resolvable:$true] %s127
          %s129 = sshll.u32 [#allocation3], 4
          %s130 = int_to_ptr.vmem [resolvable:$true] %s129
          %135 = dma.hbm_to_vmem [thread:$0]  %s128, 256, %s130, [#allocation4], 128, 128, 8
        $region16: #{tpu_custom_call.1} parent=11 // pred_fallthru
          _
        // Predicated region
        $region17: #{tpu_custom_call.1} parent=11 // pred_check
          %p136 = pneg %p81
        $region18: #{tpu_custom_call.1} parent=11 // pred_check_branch
          %138 = sbr.rel (%p136) target = $region20
        $region19: #{tpu_custom_call.1} parent=11 // pred_region
          _
        $region20: #{tpu_custom_call.1} parent=11 // pred_fallthru
          _
      $region12: #{tpu_custom_call.1} parent=5 // pred_fallthru
        _
      %p139 = scmp.lt.s32.totalorder %s13, 2
      // Predicated region
      $region21: #{tpu_custom_call.1} parent=5 // pred_check
        %p140 = pneg %p139
      $region22: #{tpu_custom_call.1} parent=5 // pred_check_branch
        %142 = sbr.rel (%p140) target = $region24
      $region23: #{tpu_custom_call.1} parent=5 // pred_region
        // Predicated region
        $region25: #{tpu_custom_call.1} parent=23 // pred_check
          %p143 = pneg %p33
        $region26: #{tpu_custom_call.1} parent=23 // pred_check_branch
          %145 = sbr.rel (%p143) target = $region28
        $region27: #{tpu_custom_call.1} parent=23 // pred_region
          %p146 = scmp.lt.s32.totalorder %s13, 1
          %s147 = scalar_select %p146, %s13, 1
          %s148 = smul.addr %s147, 8
          %s149 = scalar_lea.vmem %s0, %s148
        $region28: #{tpu_custom_call.1} parent=23 // pred_fallthru
          _
      $region24: #{tpu_custom_call.1} parent=5 // pred_fallthru
        _
      %p150 = scmp.le.s32.totalorder 1, %s13
      %p151 = scmp.lt.s32.totalorder %s13, 3
      %p152 = pnand %p150, %p151
      %p153 = pneg %p152
      // Predicated region
      $region29: #{tpu_custom_call.1} parent=5 // pred_check
        _
      $region30: #{tpu_custom_call.1} parent=5 // pred_check_branch
        %155 = sbr.rel (%p152) target = $region32
      $region31: #{tpu_custom_call.1} parent=5 // pred_region
        %s156 = ssub.s32 %s13, 1
        // Predicated region
        $region33: #{tpu_custom_call.1} parent=31 // pred_check
          %p157 = pneg %p60
        $region34: #{tpu_custom_call.1} parent=31 // pred_check_branch
          %159 = sbr.rel (%p157) target = $region36
        $region35: #{tpu_custom_call.1} parent=31 // pred_region
          %161 = dma.done [#allocation4], 256
        $region36: #{tpu_custom_call.1} parent=31 // pred_fallthru
          _
        %p162 = scmp.lt.s32.totalorder %s18, 1
        %s163 = scalar_select %p162, %s18, 1
        %s164 = smul.addr %s163, 8
        %s165 = scalar_lea.vmem %s0, %s164
        %p166 = pneg %p39
        %p167 = pneg %p36
        %p168 = pneg %p60
        %p169 = pneg %p57
        %p170 = pneg %p81
        %p171 = pneg %p78
        %p172 = pneg %p107
        %p173 = pneg %p104
        %s174 = sand.u32 %s94, 1
        %s175 = scalar_lea.sflag [#allocation5], %s174
        %s176 = sand.u32 %s94, 1
        %s177 = smul.addr %s176, 8
        %s178 = scalar_lea.vmem [#allocation6], %s177
        %p179 = scmp.lt.s32.totalorder %s18, 1
        %s180 = scalar_select %p179, %s18, 1
        %s181 = smul.addr %s180, 8
        %s182 = scalar_lea.vmem %s0, %s181
        %v183 = vld [vmem:[%s182] sm:$0xff]
        %185 = vrot.lane.b32.xlu0 %v183, 127
        %v186 = vpop.permute.xlu0 %185
        %v188 = vld [vmem:[#allocation3] sm:$0xff]
        %v189 = vld [vmem:[%s2] sm:$0xff]
        %191 = vset.pattern.permute.xlu0 0
        %192 = vperm.xlu0 %191, %v189
        %v193 = vpop.permute.xlu0 %192
        %vm195 = vcmask 130048
        %v197 = vsel %vm195, %v188, 0
        %199 = vmatpush.msra.mxu0 0.0
        %200 = vmatpush.msra.mxu0 0.0
        %201 = vmatpush.msra.mxu0 0.0
        %202 = vmatpush.msra.mxu0 0.0
        %203 = vmatpush.msra.mxu0 0.0
        %204 = vmatpush.msra.mxu0 0.0
        %205 = vmatpush.msra.mxu0 0.0
        %206 = vmatpush.msra.mxu0 0.0
        %207 = vmatpush.msra.mxu0 0.0
        %208 = vmatpush.msra.mxu0 0.0
        %209 = vmatpush.msra.mxu0 0.0
        %210 = vmatpush.msra.mxu0 0.0
        %211 = vmatpush.msra.mxu0 0.0
        %212 = vmatpush.msra.mxu0 0.0
        %213 = vmatpush.msra.mxu0 %v186
        %214 = vmatpush.msra.mxu0 %v183
        %215 = vmatmul.f32.gmra.mxu0 %v197
        %v216 = vpop.f32.mrf.mxu0
        %v217 = vadd.f32 %v193, %v216
        %218 = vdwg.mxu0
        %v219 = vmax.f32 %v217, 0.0
        %vm220 = vcmask 7168
        %221 = vst.msk [vmem:[#allocation2] sm:$0xff] %vm220, 0.0
        %vm222 = vcmask 138368
        %223 = vst.msk [vmem:[#allocation2] sm:$0xff] %vm222, 0.0
        %225 = vrot.lane.b32.xlu0 %v219, 1
        %v226 = vpop.permute.xlu0 %225
        %vm228 = vcmask 130056
        %229 = vst.msk [vmem:[#allocation2] sm:$0xff] %vm228, %v226
        %v230 = vld [vmem:[#allocation2] sm:$0xff]
        %232 = vrot.lane.b32.xlu0 %v230, 126
        %v233 = vpop.permute.xlu0 %232
        %s235 = scalar_lea.vmem [#allocation3], 8
        %v236 = vld [vmem:[%s235] sm:$0xff]
        %s237 = scalar_lea.vmem %s2, 8
        %v238 = vld [vmem:[%s237] sm:$0xff]
        %240 = vset.pattern.permute.xlu0 0
        %241 = vperm.xlu0 %240, %v238
        %v242 = vpop.permute.xlu0 %241
        %v245 = vsel %vm195, %v236, 0
        %247 = vmatpush.msra.mxu0 0.0
        %248 = vmatpush.msra.mxu0 0.0
        %249 = vmatpush.msra.mxu0 0.0
        %250 = vmatpush.msra.mxu0 0.0
        %251 = vmatpush.msra.mxu0 0.0
        %252 = vmatpush.msra.mxu0 0.0
        %253 = vmatpush.msra.mxu0 0.0
        %254 = vmatpush.msra.mxu0 0.0
        %255 = vmatpush.msra.mxu0 0.0
        %256 = vmatpush.msra.mxu0 0.0
        %257 = vmatpush.msra.mxu0 0.0
        %258 = vmatpush.msra.mxu0 0.0
        %259 = vmatpush.msra.mxu0 0.0
        %260 = vmatpush.msra.mxu0 0.0
        %261 = vmatpush.msra.mxu0 %v233
        %262 = vmatpush.msra.mxu0 %v230
        %263 = vmatmul.f32.gmra.mxu0 %v245
        %v264 = vpop.f32.mrf.mxu0
        %v265 = vadd.f32 %v242, %v264
        %266 = vdwg.mxu0
        %v267 = vmax.f32 %v265, 0.0
        %vm268 = vcmask 121856
        %v269 = vsel %vm268, %v267, 0.0
        %270 = vst [vmem:[%s178] sm:$0xff] %v269
        %s271 = sand.u32 %s94, 1
        %s272 = scalar_lea.sflag [#allocation5], %s271
        %s273 = sand.u32 %s94, 1
        %s274 = smul.addr %s273, 8
        %s275 = scalar_lea.vmem [#allocation6], %s274
        // Predicated region
        $region37: #{tpu_custom_call.1} parent=31 // pred_check
          %p276 = pneg %p104
        $region38: #{tpu_custom_call.1} parent=31 // pred_check_branch
          %278 = sbr.rel (%p276) target = $region40
        $region39: #{tpu_custom_call.1} parent=31 // pred_region
          %280 = vsyncadd %s272, 0
          %s281 = smul.addr %s18, 8
          %s282 = scalar_lea.hbm %s3, %s281
          %s284 = sshll.u32 %s275, 4
          %s285 = int_to_ptr.vmem [resolvable:$true] %s284
          %s286 = sshll.u32 %s282, 4
          %s287 = int_to_ptr.hbm [resolvable:$true] %s286
          %289 = dma.vmem_to_hbm [thread:$0]  %s285, 128, %s287, %s272
        $region40: #{tpu_custom_call.1} parent=31 // pred_fallthru
          _
      $region32: #{tpu_custom_call.1} parent=5 // pred_fallthru
        _
      %p290 = scmp.le.s32.totalorder 2, %s13
      // Predicated region
      $region41: #{tpu_custom_call.1} parent=5 // pred_check
        %p291 = pneg %p290
      $region42: #{tpu_custom_call.1} parent=5 // pred_check_branch
        %293 = sbr.rel (%p291) target = $region44
      $region43: #{tpu_custom_call.1} parent=5 // pred_region
        %s294 = ssub.s32 %s13, 2
        // Predicated region
        $region45: #{tpu_custom_call.1} parent=43 // pred_check
          %p295 = pneg %p110
        $region46: #{tpu_custom_call.1} parent=43 // pred_check_branch
          %297 = sbr.rel (%p295) target = $region48
        $region47: #{tpu_custom_call.1} parent=43 // pred_region
          %s298 = sand.u32 %s95, 1
          %s299 = scalar_lea.sflag [#allocation5], %s298
          %s300 = sand.u32 %s95, 1
          %s301 = smul.addr %s300, 8
          %s302 = scalar_lea.vmem [#allocation6], %s301
          %304 = dma.done %s299, 128
        $region48: #{tpu_custom_call.1} parent=43 // pred_fallthru
          _
      $region44: #{tpu_custom_call.1} parent=5 // pred_fallthru
        _
    $region6: #{tpu_custom_call.1} parent=1 // loop_footer
      %s17 = sadd.s32 1, %s13
    $region7: #{tpu_custom_call.1} parent=1 // loop_footer_branch
      %12 = sbr.rel target = $region3
    $region8: #{tpu_custom_call.1} parent=1 // loop_exit
      _
    %305 = vsyncpa [#allocation4], 1
    %s306 = scalar_lea.sflag [#allocation4], 1
    %307 = vsyncpa %s306, 1
    %308 = vsyncpa [#allocation5], 1
    %s309 = scalar_lea.sflag [#allocation5], 1
    %310 = vsyncpa %s309, 1

</llo_original>
